<compile_context>
chip_gen: v6e
topology: v6e:2x2x1
jax: 0.10.0
libtpu: 0.0.40
codegen_flags: <defaults>
</compile_context>

<pallas_src>
import jax
import jax.numpy as jnp
from jax.experimental import pallas as pl
from jax.experimental.pallas import tpu as pltpu

# ---------------- Problem sizes (small EEG mini-example) ----------------
B = 2        # batch
C = 4        # EEG channels
T = 16       # time samples
D = C * T    # flattened feature dim = 64
H = 32       # hidden dim
L = 8        # latent dim

# ---------------- Packed-slab layout constants ----------------
# One resident param slab: weight blocks stacked by rows (all sublane-aligned
# offsets), then 4 bias rows, 128 lanes wide, padded to a multiple of 8 rows.
W_E1_R0 = 0               # w_e1   : (D, H)  = (64, 32)
W_HD_R0 = W_E1_R0 + D     # w_head : (H, 2L) = (32, 16)   (fused mu|log_var)
W_D1_R0 = W_HD_R0 + H     # w_d1   : (L, H)  = (8, 32)
W_D2_R0 = W_D1_R0 + L     # w_d2   : (H, D)  = (32, 64)
B_R0    = W_D2_R0 + H     # bias rows start (=136, sublane-aligned)
B_E1_ROW = B_R0 + 0
B_HD_ROW = B_R0 + 1
B_D1_ROW = B_R0 + 2
B_D2_ROW = B_R0 + 3
P_ROWS = ((B_R0 + 4 + 7) // 8) * 8   # 144 rows (multiple of 8)
P_COLS = 128

# Packed output slab: [z_mean(L) | log_var(L) | recon(D) | pad] -> 128 lanes.
OUT_COLS = 128
ZM_C0 = 0
LV_C0 = L
RC_C0 = 2 * L
PAD_COLS = OUT_COLS - (2 * L + D)   # 48


def _round_up(n, m):
    return ((n + m - 1) // m) * m


# ---------------- Kernel ----------------
def vae_kernel(x_ref, eps_ref, p_ref, out_ref):
    x = x_ref[...]          # (TB, D) f32
    eps = eps_ref[...]      # (TB, L) f32

    # Static slices of the resident param slab (sublane-aligned row starts).
    w_e1 = p_ref[W_E1_R0:W_E1_R0 + D, 0:H]
    w_hd = p_ref[W_HD_R0:W_HD_R0 + H, 0:2 * L]
    w_d1 = p_ref[W_D1_R0:W_D1_R0 + L, 0:H]
    w_d2 = p_ref[W_D2_R0:W_D2_R0 + H, 0:D]

    b_e1 = p_ref[B_E1_ROW:B_E1_ROW + 1, 0:H]
    b_hd = p_ref[B_HD_ROW:B_HD_ROW + 1, 0:2 * L]
    b_d1 = p_ref[B_D1_ROW:B_D1_ROW + 1, 0:H]
    b_d2 = p_ref[B_D2_ROW:B_D2_ROW + 1, 0:D]

    # ---- Encoder ----
    h_enc = jnp.dot(x, w_e1, preferred_element_type=jnp.float32) + b_e1
    h_enc = jnp.maximum(h_enc, 0.0)

    # Fused mean / log_var head: one (H, 2L) matmul instead of two.
    head = jnp.dot(h_enc, w_hd, preferred_element_type=jnp.float32) + b_hd
    z_mean = head[:, 0:L]
    log_var = head[:, L:2 * L]

    # ---- Reparameterization ----
    z = z_mean + jnp.exp(0.5 * log_var) * eps

    # ---- Decoder ----
    h_dec = jnp.dot(z, w_d1, preferred_element_type=jnp.float32) + b_d1
    h_dec = jnp.maximum(h_dec, 0.0)
    recon = jax.nn.sigmoid(
        jnp.dot(h_dec, w_d2, preferred_element_type=jnp.float32) + b_d2)

    # Single lane-dense 128-wide output store (no masked partial stores).
    pad = jnp.zeros((x.shape[0], PAD_COLS), jnp.float32)
    out_ref[...] = jnp.concatenate([z_mean, log_var, recon, pad], axis=-1)


# ---------------- Wrapper ----------------
def vae_forward(x_flat, eps, p_slab, *, max_batch_tile=256):
    """x_flat: (B, D) f32, eps: (B, L) f32, p_slab from pack_params()."""
    bsz = x_flat.shape[0]
    tb = min(_round_up(bsz, 8), max_batch_tile)      # sublane-aligned batch tile
    padded = _round_up(bsz, tb)
    if padded != bsz:
        x_flat = jnp.pad(x_flat, ((0, padded - bsz), (0, 0)))
        eps = jnp.pad(eps, ((0, padded - bsz), (0, 0)))

    out = pl.pallas_call(
        vae_kernel,
        out_shape=jax.ShapeDtypeStruct((padded, OUT_COLS), jnp.float32),
        grid_spec=pltpu.PrefetchScalarGridSpec(
            num_scalar_prefetch=0,
            grid=(padded // tb,),
            in_specs=[
                pl.BlockSpec((tb, D), lambda i: (i, 0)),           # x tile
                pl.BlockSpec((tb, L), lambda i: (i, 0)),           # eps tile
                pl.BlockSpec((P_ROWS, P_COLS), lambda i: (0, 0)),  # resident params
            ],
            out_specs=pl.BlockSpec((tb, OUT_COLS), lambda i: (i, 0)),
        ),
        compiler_params=pltpu.CompilerParams(
            dimension_semantics=("parallel",)),   # megacore-shard batch
    )(x_flat, eps, p_slab)

    z_mean = out[:bsz, ZM_C0:ZM_C0 + L]
    log_var = out[:bsz, LV_C0:LV_C0 + L]
    recon_flat = out[:bsz, RC_C0:RC_C0 + D]
    return z_mean, log_var, recon_flat


# ---------------- Parameter init / packing ----------------
def init_params(key):
    """Deterministic small-scale init (synthetic weights, not a checkpoint load)."""
    ks = jax.random.split(key, 5)
    scale = 0.1

    def w(k, shape):
        return (scale * jax.random.normal(k, shape)).astype(jnp.float32)

    w_e1 = w(ks[0], (D, H)); b_e1 = jnp.zeros((1, H), jnp.float32)
    w_mu = w(ks[1], (H, L)); b_mu = jnp.zeros((1, L), jnp.float32)
    w_lv = w(ks[2], (H, L)); b_lv = jnp.zeros((1, L), jnp.float32)
    w_d1 = w(ks[3], (L, H)); b_d1 = jnp.zeros((1, H), jnp.float32)
    w_d2 = w(ks[4], (H, D)); b_d2 = jnp.zeros((1, D), jnp.float32)
    return (w_e1, b_e1, w_mu, b_mu, w_lv, b_lv, w_d1, b_d1, w_d2, b_d2)


def pack_params(params):
    """Host-side one-time packing of 10 tensors into a single VMEM-friendly slab."""
    w_e1, b_e1, w_mu, b_mu, w_lv, b_lv, w_d1, b_d1, w_d2, b_d2 = params
    w_hd = jnp.concatenate([w_mu, w_lv], axis=1)     # (H, 2L)
    b_hd = jnp.concatenate([b_mu, b_lv], axis=1)     # (1, 2L)

    p_slab = jnp.zeros((P_ROWS, P_COLS), jnp.float32)
    p_slab = p_slab.at[W_E1_R0:W_E1_R0 + D, :H].set(w_e1)
    p_slab = p_slab.at[W_HD_R0:W_HD_R0 + H, :2 * L].set(w_hd)
    p_slab = p_slab.at[W_D1_R0:W_D1_R0 + L, :H].set(w_d1)
    p_slab = p_slab.at[W_D2_R0:W_D2_R0 + H, :D].set(w_d2)
    p_slab = p_slab.at[B_E1_ROW, :H].set(b_e1[0])
    p_slab = p_slab.at[B_HD_ROW, :2 * L].set(b_hd[0])
    p_slab = p_slab.at[B_D1_ROW, :H].set(b_d1[0])
    p_slab = p_slab.at[B_D2_ROW, :D].set(b_d2[0])
    return p_slab


# ---------------- Pure-JAX reference for correctness ----------------
def vae_reference(x_flat, eps, params):
    w_e1, b_e1, w_mu, b_mu, w_lv, b_lv, w_d1, b_d1, w_d2, b_d2 = params
    h = jnp.maximum(x_flat @ w_e1 + b_e1, 0.0)
    z_mean = h @ w_mu + b_mu
    log_var = h @ w_lv + b_lv
    z = z_mean + jnp.exp(0.5 * log_var) * eps
    hd = jnp.maximum(z @ w_d1 + b_d1, 0.0)
    recon = jax.nn.sigmoid(hd @ w_d2 + b_d2)
    return z_mean, log_var, recon


if __name__ == "__main__":
    key = jax.random.PRNGKey(0)
    k_x, k_eps, k_p = jax.random.split(key, 3)

    x = jax.random.normal(k_x, (B, C, T), dtype=jnp.float32)    # EEG batch (B, C, T)
    eps = jax.random.normal(k_eps, (B, L), dtype=jnp.float32)   # reparam noise
    params = init_params(k_p)
    p_slab = pack_params(params)

    x_flat = x.reshape(B, -1)                                   # flatten once, outside
    fwd = jax.jit(vae_forward)
    z_mean, log_var, recon_flat = fwd(x_flat, eps, p_slab)
    recon = recon_flat.reshape(x.shape)
    jax.block_until_ready((z_mean, log_var, recon))

    # Correctness check against a pure-JAX reference.
    zm_ref, lv_ref, rc_ref = vae_reference(x_flat, eps, params)
    assert z_mean.shape == (B, L) and log_var.shape == (B, L) and recon.shape == (B, C, T)
    assert bool(jnp.allclose(z_mean, zm_ref, rtol=1e-5, atol=1e-5))
    assert bool(jnp.allclose(log_var, lv_ref, rtol=1e-5, atol=1e-5))
    assert bool(jnp.allclose(recon_flat, rc_ref, rtol=1e-5, atol=1e-5))
    print("KERNEL_OK")
</pallas_src>

<mosaic_0001>
module attributes {stable_mosaic.version = 11 : i64} {
  func.func @vae_kernel(%arg0: i32, %arg1: memref<8x64xf32, #tpu.memory_space<vmem>>, %arg2: memref<8x8xf32, #tpu.memory_space<vmem>>, %arg3: memref<144x128xf32, #tpu.memory_space<vmem>>, %arg4: memref<8x128xf32, #tpu.memory_space<vmem>>) attributes {dimension_semantics = [#tpu.dimension_semantics<parallel>], iteration_bounds = array<i64: 1>, scalar_prefetch = 0 : i64, scratch_operands = 0 : i64, tpu.core_type = #tpu.core_type<tc>, window_params = [{transform_indices = @transform_0, window_bounds = array<i64: 8, 64>}, {transform_indices = @transform_1, window_bounds = array<i64: 8, 8>}, {pipeline_mode = #tpu.pipeline_mode<synchronous>, transform_indices = @transform_2, window_bounds = array<i64: 144, 128>}, {transform_indices = @transform_3, window_bounds = array<i64: 8, 128>}]} {
    %c0 = arith.constant 0 : index
    %c0_0 = arith.constant 0 : index
    %0 = vector.load %arg1[%c0, %c0_0] : memref<8x64xf32, #tpu.memory_space<vmem>>, vector<8x64xf32>
    %c0_1 = arith.constant 0 : index
    %c0_2 = arith.constant 0 : index
    %1 = vector.load %arg2[%c0_1, %c0_2] : memref<8x8xf32, #tpu.memory_space<vmem>>, vector<8x8xf32>
    %c0_3 = arith.constant 0 : index
    %c0_4 = arith.constant 0 : index
    %2 = vector.load %arg3[%c0_3, %c0_4] : memref<144x128xf32, #tpu.memory_space<vmem>>, vector<64x32xf32>
    %c64 = arith.constant 64 : index
    %c0_5 = arith.constant 0 : index
    %3 = vector.load %arg3[%c64, %c0_5] : memref<144x128xf32, #tpu.memory_space<vmem>>, vector<32x16xf32>
    %c96 = arith.constant 96 : index
    %c0_6 = arith.constant 0 : index
    %4 = vector.load %arg3[%c96, %c0_6] : memref<144x128xf32, #tpu.memory_space<vmem>>, vector<8x32xf32>
    %c104 = arith.constant 104 : index
    %c0_7 = arith.constant 0 : index
    %5 = vector.load %arg3[%c104, %c0_7] : memref<144x128xf32, #tpu.memory_space<vmem>>, vector<32x64xf32>
    %c136 = arith.constant 136 : index
    %c0_8 = arith.constant 0 : index
    %6 = vector.load %arg3[%c136, %c0_8] : memref<144x128xf32, #tpu.memory_space<vmem>>, vector<1x32xf32>
    %c137 = arith.constant 137 : index
    %c0_9 = arith.constant 0 : index
    %7 = vector.load %arg3[%c137, %c0_9] : memref<144x128xf32, #tpu.memory_space<vmem>>, vector<1x16xf32>
    %c138 = arith.constant 138 : index
    %c0_10 = arith.constant 0 : index
    %8 = vector.load %arg3[%c138, %c0_10] : memref<144x128xf32, #tpu.memory_space<vmem>>, vector<1x32xf32>
    %c139 = arith.constant 139 : index
    %c0_11 = arith.constant 0 : index
    %9 = vector.load %arg3[%c139, %c0_11] : memref<144x128xf32, #tpu.memory_space<vmem>>, vector<1x64xf32>
    %cst = arith.constant dense<0.000000e+00> : vector<8x32xf32>
    %10 = tpu.matmul %0, %2, %cst {dimension_numbers = #tpu.dot_dimension_numbers<[1], [0], [0], [1], [0, 0, 1, 1], [], []>} : vector<8x64xf32>, vector<64x32xf32>, vector<8x32xf32> -> vector<8x32xf32>
    %11 = vector.broadcast %6 : vector<1x32xf32> to vector<8x32xf32>
    %12 = arith.addf %10, %11 : vector<8x32xf32>
    %cst_12 = arith.constant 0.000000e+00 : f32
    %13 = vector.broadcast %cst_12 : f32 to vector<8x32xf32>
    %14 = arith.maximumf %12, %13 : vector<8x32xf32>
    %cst_13 = arith.constant dense<0.000000e+00> : vector<8x16xf32>
    %15 = tpu.matmul %14, %3, %cst_13 {dimension_numbers = #tpu.dot_dimension_numbers<[1], [0], [0], [1], [0, 0, 1, 1], [], []>} : vector<8x32xf32>, vector<32x16xf32>, vector<8x16xf32> -> vector<8x16xf32>
    %16 = vector.broadcast %7 : vector<1x16xf32> to vector<8x16xf32>
    %17 = arith.addf %15, %16 : vector<8x16xf32>
    %18 = vector.extract_strided_slice %17 {offsets = [0, 0], sizes = [8, 8], strides = [1, 1]} : vector<8x16xf32> to vector<8x8xf32>
    %19 = vector.extract_strided_slice %17 {offsets = [0, 8], sizes = [8, 8], strides = [1, 1]} : vector<8x16xf32> to vector<8x8xf32>
    %cst_14 = arith.constant 5.000000e-01 : f32
    %20 = vector.broadcast %cst_14 : f32 to vector<8x8xf32>
    %21 = arith.mulf %20, %19 : vector<8x8xf32>
    %22 = math.exp %21 : vector<8x8xf32>
    %23 = arith.mulf %22, %1 : vector<8x8xf32>
    %24 = arith.addf %18, %23 : vector<8x8xf32>
    %cst_15 = arith.constant dense<0.000000e+00> : vector<8x32xf32>
    %25 = tpu.matmul %24, %4, %cst_15 {dimension_numbers = #tpu.dot_dimension_numbers<[1], [0], [0], [1], [0, 0, 1, 1], [], []>} : vector<8x8xf32>, vector<8x32xf32>, vector<8x32xf32> -> vector<8x32xf32>
    %26 = vector.broadcast %8 : vector<1x32xf32> to vector<8x32xf32>
    %27 = arith.addf %25, %26 : vector<8x32xf32>
    %cst_16 = arith.constant 0.000000e+00 : f32
    %28 = vector.broadcast %cst_16 : f32 to vector<8x32xf32>
    %29 = arith.maximumf %27, %28 : vector<8x32xf32>
    %cst_17 = arith.constant dense<0.000000e+00> : vector<8x64xf32>
    %30 = tpu.matmul %29, %5, %cst_17 {dimension_numbers = #tpu.dot_dimension_numbers<[1], [0], [0], [1], [0, 0, 1, 1], [], []>} : vector<8x32xf32>, vector<32x64xf32>, vector<8x64xf32> -> vector<8x64xf32>
    %31 = vector.broadcast %9 : vector<1x64xf32> to vector<8x64xf32>
    %32 = arith.addf %30, %31 : vector<8x64xf32>
    %33 = arith.negf %32 : vector<8x64xf32>
    %34 = math.exp %33 : vector<8x64xf32>
    %cst_18 = arith.constant 1.000000e+00 : f32
    %35 = vector.broadcast %cst_18 : f32 to vector<8x64xf32>
    %36 = arith.addf %35, %34 : vector<8x64xf32>
    %37 = arith.divf %35, %36 : vector<8x64xf32>
    %cst_19 = arith.constant 0.000000e+00 : f32
    %38 = vector.broadcast %cst_19 : f32 to vector<8x48xf32>
    %39 = tpu.concatenate %18, %19, %37, %38 in 1 : vector<8x8xf32>, vector<8x8xf32>, vector<8x64xf32>, vector<8x48xf32> -> vector<8x128xf32>
    %c0_20 = arith.constant 0 : index
    %c0_21 = arith.constant 0 : index
    %40 = vector.load %arg4[%c0_20, %c0_21] : memref<8x128xf32, #tpu.memory_space<vmem>>, vector<8x128xf32>
    tpu.vector_store %arg4[%c0_20, %c0_21], %39 {strides = array<i32>} : memref<8x128xf32, #tpu.memory_space<vmem>>, vector<8x128xf32>,
    return
  }
  func.func @transform_0(%arg0: i32) -> (i32, i32) {
    %c0_i32 = arith.constant 0 : i32
    %c0_i32_0 = arith.constant 0 : i32
    return %arg0, %c0_i32 : i32, i32
  }
  func.func @transform_1(%arg0: i32) -> (i32, i32) {
    %c0_i32 = arith.constant 0 : i32
    %c0_i32_0 = arith.constant 0 : i32
    return %arg0, %c0_i32 : i32, i32
  }
  func.func @transform_2(%arg0: i32) -> (i32, i32) {
    %c0_i32 = arith.constant 0 : i32
    %c0_i32_0 = arith.constant 0 : i32
    %c0_i32_1 = arith.constant 0 : i32
    return %c0_i32, %c0_i32_0 : i32, i32
  }
  func.func @transform_3(%arg0: i32) -> (i32, i32) {
    %c0_i32 = arith.constant 0 : i32
    %c0_i32_0 = arith.constant 0 : i32
    return %arg0, %c0_i32 : i32, i32
  }
}

</mosaic_0001>

<llo_original>
// kernel: vae_forward.1
$region0: #{vae_forward.1}
  #allocation0 [shape = 'u32[]', space=smem, size = 0x4, offset = 0x4, fixed_abs, tag = 'smem constant byte address 0x4 - core index']
  #allocation1 [shape = 'u32[144,128]{1,0:T(1,128)}', space=vmem, size = 0x12000, scoped, tag = 'internal scratch']
  %s0 = inlined_call_operand.vmem [shape: f32[8,64], index: 0, kind: input, shape index: {}]
  %s1 = inlined_call_operand.vmem [shape: f32[8,8], index: 1, kind: input, shape index: {}]
  %s2 = inlined_call_operand.hbm [shape: f32[144,128], index: 2, kind: input, shape index: {}]
  %s3 = inlined_call_operand.vmem [shape: f32[8,128], index: 3, kind: output, shape index: {}]
  %s4 = sld [smem:[#allocation0]]
  $region26: #{vae_forward.1} parent=0
    _
  %s6 = ssub.s32 1, %s4
  %s7 = scalar_select 0, %s6, %s4
  $region1: #{vae_forward.1} parent=0
    #allocation2 [shape = 'u8[73728]{0}', space=vmem, size = 0x12000, scoped, tag = 'input window, operand 2, single buffered']
    #allocation3 [shape = 's32[1]{0}', space=sflag, size = 0x4, scoped, tag = 'scoped memory for vae_forward.1']
    %8 = vsyncpa [#allocation3], 0
    // Predicated region
    $region2: #{vae_forward.1} parent=1 // pred_check
      _
    $region3: #{vae_forward.1} parent=1 // pred_check_branch
      %10 = sbr.rel (0) target = $region5
    $region4: #{vae_forward.1} parent=1 // pred_region
      _
    $region5: #{vae_forward.1} parent=1 // pred_fallthru
      _
    // Predicated region
    $region6: #{vae_forward.1} parent=1 // pred_check
      _
    $region7: #{vae_forward.1} parent=1 // pred_check_branch
      %12 = sbr.rel (0) target = $region9
    $region8: #{vae_forward.1} parent=1 // pred_region
      _
    $region9: #{vae_forward.1} parent=1 // pred_fallthru
      _
    // Predicated region
    $region10: #{vae_forward.1} parent=1 // pred_check
      _
    $region11: #{vae_forward.1} parent=1 // pred_check_branch
      %14 = sbr.rel (0) target = $region13
    $region12: #{vae_forward.1} parent=1 // pred_region
      %s16 = ssub.s32 2304, 2304
      %17 = vsyncadd [#allocation3], %s16
      %s18 = sshll.u32 [#allocation2], 4
      %s19 = int_to_ptr.vmem [resolvable:$true] %s18
      %24 = dma.hbm_to_vmem [thread:$0]  %s2, 2304, %s19, [#allocation3], 128, 128, 8
    $region13: #{vae_forward.1} parent=1 // pred_fallthru
      _
    // Predicated region
    $region14: #{vae_forward.1} parent=1 // pred_check
      _
    $region15: #{vae_forward.1} parent=1 // pred_check_branch
      %26 = sbr.rel (0) target = $region17
    $region16: #{vae_forward.1} parent=1 // pred_region
      %27 = dma.done [#allocation3], 2304
    $region17: #{vae_forward.1} parent=1 // pred_fallthru
      _
    %v28 = vld [vmem:[%s0] sm:$0xff]
    %v29 = vld [vmem:[%s1] sm:$0xff]
    %v30 = vld [vmem:[#allocation2] sm:$0xff]
    %v31 = vld [vmem:[#allocation2 + $0x8] sm:$0xff]
    %v32 = vld [vmem:[#allocation2 + $0x10] sm:$0xff]
    %v33 = vld [vmem:[#allocation2 + $0x18] sm:$0xff]
    %v34 = vld [vmem:[#allocation2 + $0x20] sm:$0xff]
    %v35 = vld [vmem:[#allocation2 + $0x28] sm:$0xff]
    %v36 = vld [vmem:[#allocation2 + $0x30] sm:$0xff]
    %v37 = vld [vmem:[#allocation2 + $0x38] sm:$0xff]
    %v38 = vld [vmem:[#allocation2 + $0x40] sm:$0xff]
    %v39 = vld [vmem:[#allocation2 + $0x48] sm:$0xff]
    %v40 = vld [vmem:[#allocation2 + $0x50] sm:$0xff]
    %v41 = vld [vmem:[#allocation2 + $0x58] sm:$0xff]
    %v42 = vld [vmem:[#allocation2 + $0x60] sm:$0xff]
    %v43 = vld [vmem:[#allocation2 + $0x68] sm:$0xff]
    %v44 = vld [vmem:[#allocation2 + $0x70] sm:$0xff]
    %v45 = vld [vmem:[#allocation2 + $0x78] sm:$0xff]
    %v46 = vld [vmem:[#allocation2 + $0x80] sm:$0xff]
    %v47 = vld [vmem:[#allocation2 + $0x88] sm:$0x1]
    %v48 = vld [vmem:[#allocation2 + $0x89] sm:$0x1]
    %v49 = vld [vmem:[#allocation2 + $0x8a] sm:$0x1]
    %v50 = vld [vmem:[#allocation2 + $0x8b] sm:$0x1]
    %v51 = vlaneseq
    %v52 = vshrl.u32 %v51, 7
    %v53 = vsub.s32 0, %v52
    %v54 = vrot.slane %v47, %v53
    %vm55 = vcmask 523264
    %v57 = vsel %vm55, %v28, 0
    %59 = vmatprep.subr.mxu0 0.0
    %60 = vmatpush1.msra.mxu0 0.0
    %61 = vmatprep.subr.mxu0 0.0
    %62 = vmatpush1.msra.mxu0 0.0
    %63 = vmatprep.subr.mxu0 0.0
    %64 = vmatpush1.msra.mxu0 0.0
    %65 = vmatprep.subr.mxu0 0.0
    %66 = vmatpush1.msra.mxu0 0.0
    %67 = vmatprep.subr.mxu0 0.0
    %68 = vmatpush1.msra.mxu0 0.0
    %69 = vmatprep.subr.mxu0 0.0
    %70 = vmatpush1.msra.mxu0 0.0
    %71 = vmatprep.subr.mxu0 0.0
    %72 = vmatpush1.msra.mxu0 0.0
    %73 = vmatprep.subr.mxu0 0.0
    %74 = vmatpush1.msra.mxu0 0.0
    %75 = vmatprep.subr.mxu0 0.0
    %76 = vmatpush1.msra.mxu0 %v37
    %77 = vmatprep.subr.mxu0 0.0
    %78 = vmatpush1.msra.mxu0 %v36
    %79 = vmatprep.subr.mxu0 0.0
    %80 = vmatpush1.msra.mxu0 %v35
    %81 = vmatprep.subr.mxu0 0.0
    %82 = vmatpush1.msra.mxu0 %v34
    %83 = vmatprep.subr.mxu0 0.0
    %84 = vmatpush1.msra.mxu0 %v33
    %85 = vmatprep.subr.mxu0 0.0
    %86 = vmatpush1.msra.mxu0 %v32
    %87 = vmatprep.subr.mxu0 0.0
    %88 = vmatpush1.msra.mxu0 %v31
    %89 = vmatprep.subr.mxu0 0.0
    %90 = vmatpush1.msra.mxu0 %v30
    %91 = vmatprep.subr.mxu0 0.0
    %92 = vmatpush2.msra.mxu0 0.0
    %93 = vmatprep.subr.mxu0 0.0
    %94 = vmatpush2.msra.mxu0 0.0
    %95 = vmatprep.subr.mxu0 0.0
    %96 = vmatpush2.msra.mxu0 0.0
    %97 = vmatprep.subr.mxu0 0.0
    %98 = vmatpush2.msra.mxu0 0.0
    %99 = vmatprep.subr.mxu0 0.0
    %100 = vmatpush2.msra.mxu0 0.0
    %101 = vmatprep.subr.mxu0 0.0
    %102 = vmatpush2.msra.mxu0 0.0
    %103 = vmatprep.subr.mxu0 0.0
    %104 = vmatpush2.msra.mxu0 0.0
    %105 = vmatprep.subr.mxu0 0.0
    %106 = vmatpush2.msra.mxu0 0.0
    %107 = vmatprep.subr.mxu0 0.0
    %108 = vmatpush2.msra.mxu0 0.0
    %109 = vmatprep.subr.mxu0 0.0
    %110 = vmatpush2.msra.mxu0 0.0
    %111 = vmatprep.subr.mxu0 0.0
    %112 = vmatpush2.msra.mxu0 0.0
    %113 = vmatprep.subr.mxu0 0.0
    %114 = vmatpush2.msra.mxu0 0.0
    %115 = vmatprep.subr.mxu0 0.0
    %116 = vmatpush2.msra.mxu0 0.0
    %117 = vmatprep.subr.mxu0 0.0
    %118 = vmatpush2.msra.mxu0 0.0
    %119 = vmatprep.subr.mxu0 0.0
    %120 = vmatpush2.msra.mxu0 0.0
    %121 = vmatprep.subr.mxu0 0.0
    %122 = vmatpush2.msra.mxu0 0.0
    %123 = vmatprep.mubr.f32.mxu0 0.0
    %124 = vmatmul.mubr.f32.gmra.mxu0 %v57
    %v125 = vpop.f32.mrf.mxu0
    %v126 = vadd.f32 %v54, %v125
    %v127 = vpop.f32.mrf.mxu0
    %128 = vdwg.mxu0
    %v129 = vmax.f32 %v126, 0.0
    %v130 = vlaneseq
    %v131 = vshrl.u32 %v130, 7
    %v132 = vsub.s32 0, %v131
    %v133 = vrot.slane %v48, %v132
    %vm134 = vcmask 261120
    %v136 = vsel %vm134, %v129, 0
    %138 = vmatprep.subr.mxu0 0.0
    %139 = vmatpush1.msra.mxu0 0.0
    %140 = vmatprep.subr.mxu0 0.0
    %141 = vmatpush1.msra.mxu0 0.0
    %142 = vmatprep.subr.mxu0 0.0
    %143 = vmatpush1.msra.mxu0 0.0
    %144 = vmatprep.subr.mxu0 0.0
    %145 = vmatpush1.msra.mxu0 0.0
    %146 = vmatprep.subr.mxu0 0.0
    %147 = vmatpush1.msra.mxu0 0.0
    %148 = vmatprep.subr.mxu0 0.0
    %149 = vmatpush1.msra.mxu0 0.0
    %150 = vmatprep.subr.mxu0 0.0
    %151 = vmatpush1.msra.mxu0 0.0
    %152 = vmatprep.subr.mxu0 0.0
    %153 = vmatpush1.msra.mxu0 0.0
    %154 = vmatprep.subr.mxu0 0.0
    %155 = vmatpush1.msra.mxu0 0.0
    %156 = vmatprep.subr.mxu0 0.0
    %157 = vmatpush1.msra.mxu0 0.0
    %158 = vmatprep.subr.mxu0 0.0
    %159 = vmatpush1.msra.mxu0 0.0
    %160 = vmatprep.subr.mxu0 0.0
    %161 = vmatpush1.msra.mxu0 0.0
    %162 = vmatprep.subr.mxu0 0.0
    %163 = vmatpush1.msra.mxu0 %v41
    %164 = vmatprep.subr.mxu0 0.0
    %165 = vmatpush1.msra.mxu0 %v40
    %166 = vmatprep.subr.mxu0 0.0
    %167 = vmatpush1.msra.mxu0 %v39
    %168 = vmatprep.subr.mxu0 0.0
    %169 = vmatpush1.msra.mxu0 %v38
    %170 = vmatprep.subr.mxu0 0.0
    %171 = vmatpush2.msra.mxu0 0.0
    %172 = vmatprep.subr.mxu0 0.0
    %173 = vmatpush2.msra.mxu0 0.0
    %174 = vmatprep.subr.mxu0 0.0
    %175 = vmatpush2.msra.mxu0 0.0
    %176 = vmatprep.subr.mxu0 0.0
    %177 = vmatpush2.msra.mxu0 0.0
    %178 = vmatprep.subr.mxu0 0.0
    %179 = vmatpush2.msra.mxu0 0.0
    %180 = vmatprep.subr.mxu0 0.0
    %181 = vmatpush2.msra.mxu0 0.0
    %182 = vmatprep.subr.mxu0 0.0
    %183 = vmatpush2.msra.mxu0 0.0
    %184 = vmatprep.subr.mxu0 0.0
    %185 = vmatpush2.msra.mxu0 0.0
    %186 = vmatprep.subr.mxu0 0.0
    %187 = vmatpush2.msra.mxu0 0.0
    %188 = vmatprep.subr.mxu0 0.0
    %189 = vmatpush2.msra.mxu0 0.0
    %190 = vmatprep.subr.mxu0 0.0
    %191 = vmatpush2.msra.mxu0 0.0
    %192 = vmatprep.subr.mxu0 0.0
    %193 = vmatpush2.msra.mxu0 0.0
    %194 = vmatprep.subr.mxu0 0.0
    %195 = vmatpush2.msra.mxu0 0.0
    %196 = vmatprep.subr.mxu0 0.0
    %197 = vmatpush2.msra.mxu0 0.0
    %198 = vmatprep.subr.mxu0 0.0
    %199 = vmatpush2.msra.mxu0 0.0
    %200 = vmatprep.subr.mxu0 0.0
    %201 = vmatpush2.msra.mxu0 0.0
    %202 = vmatprep.mubr.f32.mxu0 0.0
    %203 = vmatmul.mubr.f32.gmra.mxu0 %v136
    %v204 = vpop.f32.mrf.mxu0
    %v205 = vadd.f32 %v133, %v204
    %v206 = vpop.f32.mrf.mxu0
    %207 = vdwg.mxu0
    %v208 = vmul.f32 %v205, 0.5
    %v209 = vmul.f32 %v208, 1.442695
    %v210 = vpow.pop %v209
    %212 = vrot.lane.b32.xlu0 %v29, 8
    %v213 = vpop.permute.xlu0 %212
    %v215 = vmul.f32 %v210, %v213
    %217 = vrot.lane.b32.xlu0 %v215, 120
    %v218 = vpop.permute.xlu0 %217
    %v220 = vadd.f32 %v205, %v218
    %v221 = vlaneseq
    %v222 = vshrl.u32 %v221, 7
    %v223 = vsub.s32 0, %v222
    %v224 = vrot.slane %v49, %v223
    %vm225 = vcmask 64512
    %v227 = vsel %vm225, %v220, 0
    %229 = vmatprep.subr.mxu0 0.0
    %230 = vmatpush1.msra.mxu0 0.0
    %231 = vmatprep.subr.mxu0 0.0
    %232 = vmatpush1.msra.mxu0 0.0
    %233 = vmatprep.subr.mxu0 0.0
    %234 = vmatpush1.msra.mxu0 0.0
    %235 = vmatprep.subr.mxu0 0.0
    %236 = vmatpush1.msra.mxu0 0.0
    %237 = vmatprep.subr.mxu0 0.0
    %238 = vmatpush1.msra.mxu0 0.0
    %239 = vmatprep.subr.mxu0 0.0
    %240 = vmatpush1.msra.mxu0 0.0
    %241 = vmatprep.subr.mxu0 0.0
    %242 = vmatpush1.msra.mxu0 0.0
    %243 = vmatprep.subr.mxu0 0.0
    %244 = vmatpush1.msra.mxu0 0.0
    %245 = vmatprep.subr.mxu0 0.0
    %246 = vmatpush1.msra.mxu0 0.0
    %247 = vmatprep.subr.mxu0 0.0
    %248 = vmatpush1.msra.mxu0 0.0
    %249 = vmatprep.subr.mxu0 0.0
    %250 = vmatpush1.msra.mxu0 0.0
    %251 = vmatprep.subr.mxu0 0.0
    %252 = vmatpush1.msra.mxu0 0.0
    %253 = vmatprep.subr.mxu0 0.0
    %254 = vmatpush1.msra.mxu0 0.0
    %255 = vmatprep.subr.mxu0 0.0
    %256 = vmatpush1.msra.mxu0 0.0
    %257 = vmatprep.subr.mxu0 0.0
    %258 = vmatpush1.msra.mxu0 0.0
    %259 = vmatprep.subr.mxu0 0.0
    %260 = vmatpush1.msra.mxu0 %v42
    %261 = vmatprep.subr.mxu0 0.0
    %262 = vmatpush2.msra.mxu0 0.0
    %263 = vmatprep.subr.mxu0 0.0
    %264 = vmatpush2.msra.mxu0 0.0
    %265 = vmatprep.subr.mxu0 0.0
    %266 = vmatpush2.msra.mxu0 0.0
    %267 = vmatprep.subr.mxu0 0.0
    %268 = vmatpush2.msra.mxu0 0.0
    %269 = vmatprep.subr.mxu0 0.0
    %270 = vmatpush2.msra.mxu0 0.0
    %271 = vmatprep.subr.mxu0 0.0
    %272 = vmatpush2.msra.mxu0 0.0
    %273 = vmatprep.subr.mxu0 0.0
    %274 = vmatpush2.msra.mxu0 0.0
    %275 = vmatprep.subr.mxu0 0.0
    %276 = vmatpush2.msra.mxu0 0.0
    %277 = vmatprep.subr.mxu0 0.0
    %278 = vmatpush2.msra.mxu0 0.0
    %279 = vmatprep.subr.mxu0 0.0
    %280 = vmatpush2.msra.mxu0 0.0
    %281 = vmatprep.subr.mxu0 0.0
    %282 = vmatpush2.msra.mxu0 0.0
    %283 = vmatprep.subr.mxu0 0.0
    %284 = vmatpush2.msra.mxu0 0.0
    %285 = vmatprep.subr.mxu0 0.0
    %286 = vmatpush2.msra.mxu0 0.0
    %287 = vmatprep.subr.mxu0 0.0
    %288 = vmatpush2.msra.mxu0 0.0
    %289 = vmatprep.subr.mxu0 0.0
    %290 = vmatpush2.msra.mxu0 0.0
    %291 = vmatprep.subr.mxu0 0.0
    %292 = vmatpush2.msra.mxu0 0.0
    %293 = vmatprep.mubr.f32.mxu0 0.0
    %294 = vmatmul.mubr.f32.gmra.mxu0 %v227
    %v295 = vpop.f32.mrf.mxu0
    %v296 = vadd.f32 %v224, %v295
    %v297 = vpop.f32.mrf.mxu0
    %298 = vdwg.mxu0
    %v299 = vmax.f32 %v296, 0.0
    %v300 = vlaneseq
    %v301 = vshrl.u32 %v300, 7
    %v302 = vsub.s32 0, %v301
    %v303 = vrot.slane %v50, %v302
    %v305 = vsel %vm134, %v299, 0
    %307 = vmatprep.subr.mxu0 0.0
    %308 = vmatpush1.msra.mxu0 0.0
    %309 = vmatprep.subr.mxu0 0.0
    %310 = vmatpush1.msra.mxu0 0.0
    %311 = vmatprep.subr.mxu0 0.0
    %312 = vmatpush1.msra.mxu0 0.0
    %313 = vmatprep.subr.mxu0 0.0
    %314 = vmatpush1.msra.mxu0 0.0
    %315 = vmatprep.subr.mxu0 0.0
    %316 = vmatpush1.msra.mxu0 0.0
    %317 = vmatprep.subr.mxu0 0.0
    %318 = vmatpush1.msra.mxu0 0.0
    %319 = vmatprep.subr.mxu0 0.0
    %320 = vmatpush1.msra.mxu0 0.0
    %321 = vmatprep.subr.mxu0 0.0
    %322 = vmatpush1.msra.mxu0 0.0
    %323 = vmatprep.subr.mxu0 0.0
    %324 = vmatpush1.msra.mxu0 0.0
    %325 = vmatprep.subr.mxu0 0.0
    %326 = vmatpush1.msra.mxu0 0.0
    %327 = vmatprep.subr.mxu0 0.0
    %328 = vmatpush1.msra.mxu0 0.0
    %329 = vmatprep.subr.mxu0 0.0
    %330 = vmatpush1.msra.mxu0 0.0
    %331 = vmatprep.subr.mxu0 0.0
    %332 = vmatpush1.msra.mxu0 %v46
    %333 = vmatprep.subr.mxu0 0.0
    %334 = vmatpush1.msra.mxu0 %v45
    %335 = vmatprep.subr.mxu0 0.0
    %336 = vmatpush1.msra.mxu0 %v44
    %337 = vmatprep.subr.mxu0 0.0
    %338 = vmatpush1.msra.mxu0 %v43
    %339 = vmatprep.subr.mxu0 0.0
    %340 = vmatpush2.msra.mxu0 0.0
    %341 = vmatprep.subr.mxu0 0.0
    %342 = vmatpush2.msra.mxu0 0.0
    %343 = vmatprep.subr.mxu0 0.0
    %344 = vmatpush2.msra.mxu0 0.0
    %345 = vmatprep.subr.mxu0 0.0
    %346 = vmatpush2.msra.mxu0 0.0
    %347 = vmatprep.subr.mxu0 0.0
    %348 = vmatpush2.msra.mxu0 0.0
    %349 = vmatprep.subr.mxu0 0.0
    %350 = vmatpush2.msra.mxu0 0.0
    %351 = vmatprep.subr.mxu0 0.0
    %352 = vmatpush2.msra.mxu0 0.0
    %353 = vmatprep.subr.mxu0 0.0
    %354 = vmatpush2.msra.mxu0 0.0
    %355 = vmatprep.subr.mxu0 0.0
    %356 = vmatpush2.msra.mxu0 0.0
    %357 = vmatprep.subr.mxu0 0.0
    %358 = vmatpush2.msra.mxu0 0.0
    %359 = vmatprep.subr.mxu0 0.0
    %360 = vmatpush2.msra.mxu0 0.0
    %361 = vmatprep.subr.mxu0 0.0
    %362 = vmatpush2.msra.mxu0 0.0
    %363 = vmatprep.subr.mxu0 0.0
    %364 = vmatpush2.msra.mxu0 0.0
    %365 = vmatprep.subr.mxu0 0.0
    %366 = vmatpush2.msra.mxu0 0.0
    %367 = vmatprep.subr.mxu0 0.0
    %368 = vmatpush2.msra.mxu0 0.0
    %369 = vmatprep.subr.mxu0 0.0
    %370 = vmatpush2.msra.mxu0 0.0
    %371 = vmatprep.mubr.f32.mxu0 0.0
    %372 = vmatmul.mubr.f32.gmra.mxu0 %v305
    %v373 = vpop.f32.mrf.mxu0
    %v374 = vadd.f32 %v303, %v373
    %v375 = vpop.f32.mrf.mxu0
    %376 = vdwg.mxu0
    %v377 = vxor.u32 %v374, 2147483648
    %v378 = vmul.f32 %v377, 1.442695
    %v379 = vpow.pop %v378
    %v380 = vadd.f32 %v379, 1.0
    %v381 = vrcp.pop %v380
    %v382 = vmul.f32 1.0, %v381
    %384 = vrot.lane.b32.xlu0 %v382, 16
    %v385 = vpop.permute.xlu0 %384
    %vm387 = vcmask 130048
    %v388 = vsel %vm387, %v205, %v385
    %vm389 = vcmask 654336
    %v390 = vsel %vm389, %v388, 0.0
    %391 = vst [vmem:[%s3] sm:$0xff] %v390
    // Predicated region
    $region18: #{vae_forward.1} parent=1 // pred_check
      _
    $region19: #{vae_forward.1} parent=1 // pred_check_branch
      %393 = sbr.rel (0) target = $region21
    $region20: #{vae_forward.1} parent=1 // pred_region
      _
    $region21: #{vae_forward.1} parent=1 // pred_fallthru
      _
    // Predicated region
    $region22: #{vae_forward.1} parent=1 // pred_check
      _
    $region23: #{vae_forward.1} parent=1 // pred_check_branch
      %395 = sbr.rel (0) target = $region25
    $region24: #{vae_forward.1} parent=1 // pred_region
      _
    $region25: #{vae_forward.1} parent=1 // pred_fallthru
      _
    %396 = vsyncpa [#allocation3], 1

</llo_original>
